<compile_context>
chip_gen: v7x
topology: tpu7x:2x2x1
jax: 0.10.0
libtpu: 0.0.40
codegen_flags: <defaults>
</compile_context>

<pallas_src>
import functools

import jax
import jax.numpy as jnp
from jax.experimental import pallas as pl
from jax.experimental.pallas import tpu as pltpu


def _round_up(n, m):
    return ((n + m - 1) // m) * m


# Leave headroom under v7x's 64 MiB per-TC VMEM; re-derive (raise) for real
# BERT shapes on v5e/v6e (128 MiB physical).
_VMEM_LIMIT_BYTES = 48 * 1024 * 1024

# GELU tanh-approximation constants, pre-folded: 0.79788456*(f + 0.044715*f^3)
#   == f * (_GELU_C0 + _GELU_C1 * f*f)
_GELU_C0 = 0.7978845608028654
_GELU_C1 = 0.035677408136300125


def _const_spec(shape):
    """BlockSpec for a grid-invariant operand; single-buffered when supported."""
    try:
        return pl.BlockSpec(shape, lambda b: (0, 0), pipeline_mode=pl.Buffered(1))
    except (TypeError, AttributeError):   # older jax without pipeline_mode
        return pl.BlockSpec(shape, lambda b: (0, 0))


# ----------------------------- encoder layer kernel -----------------------------

def encoder_layer_kernel(x_ref, mb_ref,
                         wqkv_ref, bqkv_ref, wo_ref, bo_ref,
                         g1_ref, be1_ref,
                         w1_ref, b1_ref, w2_ref, b2_ref,
                         g2_ref, be2_ref, *rest, real_h, with_classifier):
    if with_classifier:
        cls_w_ref, cls_b_ref, out_ref, logits_ref = rest
    else:
        (out_ref,) = rest

    Bb, S, Hp = x_ref.shape
    M = Bb * S

    xb = x_ref[...].reshape(M, Hp)                       # bf16 (stored bf16 between layers)
    x = xb.astype(jnp.float32)                           # f32 copy for residual / LN
    mb = mb_ref[...]                                     # (Bb, 1, S) additive key-mask bias

    # Lane mask for padded hidden lanes (only LayerNorm statistics need it).
    lane = jax.lax.broadcasted_iota(jnp.int32, (1, Hp), 1)
    hmask = (lane < real_h).astype(jnp.float32)          # (1, Hp)
    inv_h = 1.0 / float(real_h)

    # --- fused QKV projection over all Bb*S rows (single MXU pass) ---
    qkv = jnp.dot(xb, wqkv_ref[...], preferred_element_type=jnp.float32) + bqkv_ref[...]
    qkv = qkv.astype(jnp.bfloat16)                       # single cast; halves live intermediate
    q = qkv[:, :Hp].reshape(Bb, S, Hp)
    k = qkv[:, Hp:2 * Hp].reshape(Bb, S, Hp)
    v = qkv[:, 2 * Hp:].reshape(Bb, S, Hp)

    # --- single-head self attention per batch row (softmax in f32) ---
    scale = 1.0 / (float(real_h) ** 0.5)
    scores = jnp.einsum('bqd,bkd->bqk', q, k,
                        preferred_element_type=jnp.float32) * scale + mb   # (Bb, S, S)
    scores = scores - jnp.max(scores, axis=-1, keepdims=True)
    p = jnp.exp(scores)
    attn = p * pl.reciprocal(jnp.sum(p, axis=-1, keepdims=True), approx=True)

    ctx = jnp.einsum('bqk,bkd->bqd', attn.astype(jnp.bfloat16), v,
                     preferred_element_type=jnp.float32).reshape(M, Hp)
    attn_out = jnp.dot(ctx.astype(jnp.bfloat16), wo_ref[...],
                       preferred_element_type=jnp.float32) + bo_ref[...]

    # --- residual + masked LayerNorm 1 (f32) ---
    h = x + attn_out
    mu = jnp.sum(h * hmask, axis=-1, keepdims=True) * inv_h
    d = (h - mu) * hmask
    var = jnp.sum(d * d, axis=-1, keepdims=True) * inv_h
    h = d * jax.lax.rsqrt(var + 1e-12) * g1_ref[...] + be1_ref[...]

    # --- feed-forward (GELU tanh approximation, refactored polynomial) ---
    f = jnp.dot(h.astype(jnp.bfloat16), w1_ref[...],
                preferred_element_type=jnp.float32) + b1_ref[...]
    f = 0.5 * f * (1.0 + jnp.tanh(f * (_GELU_C0 + _GELU_C1 * (f * f))))
    f = jnp.dot(f.astype(jnp.bfloat16), w2_ref[...],
                preferred_element_type=jnp.float32) + b2_ref[...]

    # --- residual + masked LayerNorm 2 ---
    h2 = h + f
    mu2 = jnp.sum(h2 * hmask, axis=-1, keepdims=True) * inv_h
    d2 = (h2 - mu2) * hmask
    var2 = jnp.sum(d2 * d2, axis=-1, keepdims=True) * inv_h
    y = d2 * jax.lax.rsqrt(var2 + 1e-12) * g2_ref[...] + be2_ref[...]      # (M, Hp) f32

    y3 = y.reshape(Bb, S, Hp)
    out_ref[...] = y3.astype(out_ref.dtype)                                # bf16 store

    if with_classifier:
        # CLS-token linear classifier fused into the last layer (no extra launch).
        cls = y3[:, 0, :]                                                  # (Bb, Hp) f32
        logits_ref[...] = (jnp.dot(cls.astype(jnp.bfloat16), cls_w_ref[...],
                                   preferred_element_type=jnp.float32) + cls_b_ref[...])


def encoder_layer(x, mask_bias, p, real_h, *, cls_w=None, cls_b=None):
    B, S, Hp = x.shape
    Fp = p["w1"].shape[1]
    with_classifier = cls_w is not None

    # Pick Bb so the matmul M = Bb*S feeds the MXU with >= 256 rows where possible.
    bb = max(1, min(B, -(-256 // S)))
    while B % bb:
        bb -= 1
    Bb = bb

    in_specs = [
        pl.BlockSpec((Bb, S, Hp), lambda b: (b, 0, 0)),      # x
        pl.BlockSpec((Bb, 1, S), lambda b: (b, 0, 0)),       # mask bias
        _const_spec((Hp, 3 * Hp)), _const_spec((1, 3 * Hp)),  # wqkv, bqkv
        _const_spec((Hp, Hp)), _const_spec((1, Hp)),           # wo, bo
        _const_spec((1, Hp)), _const_spec((1, Hp)),            # gamma1, beta1
        _const_spec((Hp, Fp)), _const_spec((1, Fp)),           # w1, b1
        _const_spec((Fp, Hp)), _const_spec((1, Hp)),           # w2, b2
        _const_spec((1, Hp)), _const_spec((1, Hp)),            # gamma2, beta2
    ]
    args = [x, mask_bias,
            p["wqkv"], p["bqkv"], p["wo"], p["bo"],
            p["g1"], p["be1"],
            p["w1"], p["b1"], p["w2"], p["b2"],
            p["g2"], p["be2"]]

    if with_classifier:
        Cp = cls_w.shape[1]
        in_specs += [_const_spec((Hp, Cp)), _const_spec((1, Cp))]
        args += [cls_w, cls_b]
        out_shape = (jax.ShapeDtypeStruct((B, S, Hp), jnp.bfloat16),
                     jax.ShapeDtypeStruct((B, Cp), jnp.float32))
        out_specs = (pl.BlockSpec((Bb, S, Hp), lambda b: (b, 0, 0)),
                     pl.BlockSpec((Bb, Cp), lambda b: (b, 0)))
    else:
        out_shape = jax.ShapeDtypeStruct((B, S, Hp), jnp.bfloat16)
        out_specs = pl.BlockSpec((Bb, S, Hp), lambda b: (b, 0, 0))

    kernel = functools.partial(encoder_layer_kernel, real_h=real_h,
                               with_classifier=with_classifier)

    return pl.pallas_call(
        kernel,
        out_shape=out_shape,
        grid_spec=pltpu.PrefetchScalarGridSpec(
            num_scalar_prefetch=0,
            grid=(B // Bb,),
            in_specs=in_specs,
            out_specs=out_specs,
        ),
        compiler_params=pltpu.CompilerParams(
            dimension_semantics=("parallel",),
            vmem_limit_bytes=_VMEM_LIMIT_BYTES,
        ),
    )(*args)


# ----------------------------- full forward -----------------------------

def text_classifier_forward(input_ids, attention_mask, params):
    # TODO(synk): embedding-table gather has no tidy Pallas tile pattern at toy
    # shapes; it stays in plain JAX (glue), matching AutoModel's embedding lookup.
    x = params["tok_emb"][input_ids] + params["pos_emb"][None, :, :]             # (B, S, Hp) f32
    x = x.astype(jnp.bfloat16)        # inter-layer activations travel bf16 (halves HBM traffic)
    # torch-style attention_mask (1 = keep, 0 = pad) -> additive bias on key axis
    mask_bias = ((1.0 - attention_mask.astype(jnp.float32)) * -1e9)[:, None, :]  # (B, 1, S)

    n_layers = len(params["layers"])
    logits_padded = None
    for li, layer_params in enumerate(params["layers"]):
        if li == n_layers - 1:
            x, logits_padded = encoder_layer(
                x, mask_bias, layer_params, params["hidden"],
                cls_w=params["cls_w"], cls_b=params["cls_b"])
        else:
            x = encoder_layer(x, mask_bias, layer_params, params["hidden"])

    return logits_padded[:, :params["num_labels"]]


# ----------------------------- deterministic param init -----------------------------

def init_params(key, vocab_size, seq_len, hidden, ffn, num_layers, num_labels):
    Hp = _round_up(hidden, 128)
    Fp = _round_up(ffn, 128)
    Cp = _round_up(num_labels, 128)

    keys = iter(jax.random.split(key, 4 + num_layers * 8))

    def nrm(shape, scale=0.02):
        return (scale * jax.random.normal(next(keys), shape)).astype(jnp.float32)

    def padw(a, rows, cols):   # zero-pad a 2D param to (rows, cols)
        return jnp.pad(a, ((0, rows - a.shape[0]), (0, cols - a.shape[1])))

    params = {
        "hidden": hidden,
        "num_labels": num_labels,
        "tok_emb": padw(nrm((vocab_size, hidden)), vocab_size, Hp),              # f32
        "pos_emb": padw(nrm((seq_len, hidden)), seq_len, Hp),                    # f32
        "cls_w": padw(nrm((hidden, num_labels)), Hp, Cp).astype(jnp.bfloat16),
        "cls_b": jnp.zeros((1, Cp), jnp.float32),
        "layers": [],
    }
    for _ in range(num_layers):
        wq, wk, wv = nrm((hidden, hidden)), nrm((hidden, hidden)), nrm((hidden, hidden))
        wqkv = jnp.concatenate(
            [padw(wq, Hp, Hp), padw(wk, Hp, Hp), padw(wv, Hp, Hp)], axis=1)
        layer = {
            "wqkv": wqkv.astype(jnp.bfloat16),
            "bqkv": jnp.zeros((1, 3 * Hp), jnp.float32),
            "wo": padw(nrm((hidden, hidden)), Hp, Hp).astype(jnp.bfloat16),
            "bo": jnp.zeros((1, Hp), jnp.float32),
            "g1": padw(jnp.ones((1, hidden), jnp.float32), 1, Hp),
            "be1": jnp.zeros((1, Hp), jnp.float32),
            "w1": padw(nrm((hidden, ffn)), Hp, Fp).astype(jnp.bfloat16),
            "b1": jnp.zeros((1, Fp), jnp.float32),
            "w2": padw(nrm((ffn, hidden)), Fp, Hp).astype(jnp.bfloat16),
            "b2": jnp.zeros((1, Hp), jnp.float32),
            "g2": padw(jnp.ones((1, hidden), jnp.float32), 1, Hp),
            "be2": jnp.zeros((1, Hp), jnp.float32),
        }
        params["layers"].append(layer)
    return params


if __name__ == "__main__":
    B, S, H, F, V = 2, 8, 32, 128, 100
    NUM_LAYERS = 2
    label_vocab = ["negative", "neutral", "positive", "other"]
    C = len(label_vocab)

    key = jax.random.PRNGKey(0)
    k_param, k_ids = jax.random.split(key)

    params = init_params(k_param, V, S, H, F, NUM_LAYERS, C)

    input_ids = jax.random.randint(k_ids, (B, S), 0, V, dtype=jnp.int32)
    attention_mask = jnp.array(
        [[1, 1, 1, 1, 1, 1, 1, 1],
         [1, 1, 1, 1, 1, 0, 0, 0]], dtype=jnp.int32)

    logits = text_classifier_forward(input_ids, attention_mask, params)
    jax.block_until_ready(logits)

    assert logits.shape == (B, C) and logits.dtype == jnp.float32
    assert bool(jnp.all(jnp.isfinite(logits)))
    print("KERNEL_OK")
</pallas_src>

<mosaic_0001>
module attributes {stable_mosaic.version = 11 : i64} {
  func.func @encoder_layer_kernel(%arg0: i32, %arg1: memref<2x8x128xbf16, #tpu.memory_space<vmem>>, %arg2: memref<2x1x8xf32, #tpu.memory_space<vmem>>, %arg3: memref<128x384xbf16, #tpu.memory_space<vmem>>, %arg4: memref<1x384xf32, #tpu.memory_space<vmem>>, %arg5: memref<128x128xbf16, #tpu.memory_space<vmem>>, %arg6: memref<1x128xf32, #tpu.memory_space<vmem>>, %arg7: memref<1x128xf32, #tpu.memory_space<vmem>>, %arg8: memref<1x128xf32, #tpu.memory_space<vmem>>, %arg9: memref<128x128xbf16, #tpu.memory_space<vmem>>, %arg10: memref<1x128xf32, #tpu.memory_space<vmem>>, %arg11: memref<128x128xbf16, #tpu.memory_space<vmem>>, %arg12: memref<1x128xf32, #tpu.memory_space<vmem>>, %arg13: memref<1x128xf32, #tpu.memory_space<vmem>>, %arg14: memref<1x128xf32, #tpu.memory_space<vmem>>, %arg15: memref<2x8x128xbf16, #tpu.memory_space<vmem>>) attributes {dimension_semantics = [#tpu.dimension_semantics<parallel>], iteration_bounds = array<i64: 1>, scalar_prefetch = 0 : i64, scratch_operands = 0 : i64, tpu.core_type = #tpu.core_type<tc>, window_params = [{transform_indices = @transform_0, window_bounds = array<i64: 2, 8, 128>}, {transform_indices = @transform_1, window_bounds = array<i64: 2, 1, 8>}, {pipeline_mode = #tpu.pipeline_mode<synchronous>, transform_indices = @transform_2, window_bounds = array<i64: 128, 384>}, {pipeline_mode = #tpu.pipeline_mode<synchronous>, transform_indices = @transform_3, window_bounds = array<i64: 1, 384>}, {pipeline_mode = #tpu.pipeline_mode<synchronous>, transform_indices = @transform_4, window_bounds = array<i64: 128, 128>}, {pipeline_mode = #tpu.pipeline_mode<synchronous>, transform_indices = @transform_5, window_bounds = array<i64: 1, 128>}, {pipeline_mode = #tpu.pipeline_mode<synchronous>, transform_indices = @transform_6, window_bounds = array<i64: 1, 128>}, {pipeline_mode = #tpu.pipeline_mode<synchronous>, transform_indices = @transform_7, window_bounds = array<i64: 1, 128>}, {pipeline_mode = #tpu.pipeline_mode<synchronous>, transform_indices = @transform_8, window_bounds = array<i64: 128, 128>}, {pipeline_mode = #tpu.pipeline_mode<synchronous>, transform_indices = @transform_9, window_bounds = array<i64: 1, 128>}, {pipeline_mode = #tpu.pipeline_mode<synchronous>, transform_indices = @transform_10, window_bounds = array<i64: 128, 128>}, {pipeline_mode = #tpu.pipeline_mode<synchronous>, transform_indices = @transform_11, window_bounds = array<i64: 1, 128>}, {pipeline_mode = #tpu.pipeline_mode<synchronous>, transform_indices = @transform_12, window_bounds = array<i64: 1, 128>}, {pipeline_mode = #tpu.pipeline_mode<synchronous>, transform_indices = @transform_13, window_bounds = array<i64: 1, 128>}, {transform_indices = @transform_14, window_bounds = array<i64: 2, 8, 128>}]} {
    %c0 = arith.constant 0 : index
    %c0_0 = arith.constant 0 : index
    %c0_1 = arith.constant 0 : index
    %0 = vector.load %arg1[%c0, %c0_0, %c0_1] : memref<2x8x128xbf16, #tpu.memory_space<vmem>>, vector<2x8x128xbf16>
    %1 = vector.shape_cast %0 : vector<2x8x128xbf16> to vector<16x128xbf16>
    %2 = arith.extf %1 : vector<16x128xbf16> to vector<16x128xf32>
    %c0_2 = arith.constant 0 : index
    %c0_3 = arith.constant 0 : index
    %c0_4 = arith.constant 0 : index
    %3 = vector.load %arg2[%c0_2, %c0_3, %c0_4] : memref<2x1x8xf32, #tpu.memory_space<vmem>>, vector<2x1x8xf32>
    %4 = tpu.iota {dimensions = array<i32: 1>} : vector<1x128xi32>
    %c32_i32 = arith.constant 32 : i32
    %5 = vector.broadcast %c32_i32 : i32 to vector<1x128xi32>
    %6 = arith.cmpi slt, %4, %5 : vector<1x128xi32>
    %7 = arith.extui %6 : vector<1x128xi1> to vector<1x128xi32>
    %8 = arith.sitofp %7 : vector<1x128xi32> to vector<1x128xf32>
    %c0_5 = arith.constant 0 : index
    %c0_6 = arith.constant 0 : index
    %9 = vector.load %arg3[%c0_5, %c0_6] : memref<128x384xbf16, #tpu.memory_space<vmem>>, vector<128x384xbf16>
    %cst = arith.constant dense<0.000000e+00> : vector<16x384xf32>
    %10 = tpu.matmul %1, %9, %cst {dimension_numbers = #tpu.dot_dimension_numbers<[1], [0], [0], [1], [0, 0, 1, 1], [], []>} : vector<16x128xbf16>, vector<128x384xbf16>, vector<16x384xf32> -> vector<16x384xf32>
    %c0_7 = arith.constant 0 : index
    %c0_8 = arith.constant 0 : index
    %11 = vector.load %arg4[%c0_7, %c0_8] : memref<1x384xf32, #tpu.memory_space<vmem>>, vector<1x384xf32>
    %12 = vector.broadcast %11 : vector<1x384xf32> to vector<16x384xf32>
    %13 = arith.addf %10, %12 : vector<16x384xf32>
    %14 = arith.truncf %13 : vector<16x384xf32> to vector<16x384xbf16>
    %15 = vector.extract_strided_slice %14 {offsets = [0, 0], sizes = [16, 128], strides = [1, 1]} : vector<16x384xbf16> to vector<16x128xbf16>
    %16 = vector.shape_cast %15 : vector<16x128xbf16> to vector<2x8x128xbf16>
    %17 = vector.extract_strided_slice %14 {offsets = [0, 128], sizes = [16, 128], strides = [1, 1]} : vector<16x384xbf16> to vector<16x128xbf16>
    %18 = vector.shape_cast %17 : vector<16x128xbf16> to vector<2x8x128xbf16>
    %19 = vector.extract_strided_slice %14 {offsets = [0, 256], sizes = [16, 128], strides = [1, 1]} : vector<16x384xbf16> to vector<16x128xbf16>
    %20 = vector.shape_cast %19 : vector<16x128xbf16> to vector<2x8x128xbf16>
    "tpu.trace_start"() <{level = 10 : i32, message = "bqd,bkd->bqk"}> : () -> ()
    %cst_9 = arith.constant dense<0.000000e+00> : vector<2x8x8xf32>
    %21 = tpu.matmul %16, %18, %cst_9 {dimension_numbers = #tpu.dot_dimension_numbers<[2], [2], [1], [1], [0, 0, 0, 1, 1, 1], [0], [0]>} : vector<2x8x128xbf16>, vector<2x8x128xbf16>, vector<2x8x8xf32> -> vector<2x8x8xf32>
    "tpu.trace_stop"() : () -> ()
    %cst_10 = arith.constant 0.176776692 : f32
    %22 = vector.broadcast %cst_10 : f32 to vector<2x8x8xf32>
    %23 = arith.mulf %21, %22 : vector<2x8x8xf32>
    %24 = vector.broadcast %3 : vector<2x1x8xf32> to vector<2x8x8xf32>
    %25 = arith.addf %23, %24 : vector<2x8x8xf32>
    %cst_11 = arith.constant dense<0xFF800000> : vector<2x8xf32>
    %26 = vector.multi_reduction <maximumf>, %25, %cst_11 [2] : vector<2x8x8xf32> to vector<2x8xf32>
    %27 = vector.shape_cast %26 : vector<2x8xf32> to vector<2x8x1xf32>
    %28 = vector.broadcast %27 : vector<2x8x1xf32> to vector<2x8x8xf32>
    %29 = arith.subf %25, %28 : vector<2x8x8xf32>
    %30 = math.exp %29 : vector<2x8x8xf32>
    %cst_12 = arith.constant dense<0.000000e+00> : vector<2x8xf32>
    %31 = vector.multi_reduction <add>, %30, %cst_12 [2] : vector<2x8x8xf32> to vector<2x8xf32>
    %32 = vector.shape_cast %31 : vector<2x8xf32> to vector<2x8x1xf32>
    %33 = tpu.reciprocal %32 {approx = true} : vector<2x8x1xf32> -> vector<2x8x1xf32>
    %34 = vector.broadcast %33 : vector<2x8x1xf32> to vector<2x8x8xf32>
    %35 = arith.mulf %30, %34 : vector<2x8x8xf32>
    %36 = arith.truncf %35 : vector<2x8x8xf32> to vector<2x8x8xbf16>
    "tpu.trace_start"() <{level = 10 : i32, message = "bqk,bkd->bqd"}> : () -> ()
    %cst_13 = arith.constant dense<0.000000e+00> : vector<2x8x128xf32>
    %37 = tpu.matmul %36, %20, %cst_13 {dimension_numbers = #tpu.dot_dimension_numbers<[2], [1], [1], [2], [0, 0, 0, 1, 1, 2], [0], [0]>} : vector<2x8x8xbf16>, vector<2x8x128xbf16>, vector<2x8x128xf32> -> vector<2x8x128xf32>
    "tpu.trace_stop"() : () -> ()
    %38 = vector.shape_cast %37 : vector<2x8x128xf32> to vector<16x128xf32>
    %39 = arith.truncf %38 : vector<16x128xf32> to vector<16x128xbf16>
    %c0_14 = arith.constant 0 : index
    %c0_15 = arith.constant 0 : index
    %40 = vector.load %arg5[%c0_14, %c0_15] : memref<128x128xbf16, #tpu.memory_space<vmem>>, vector<128x128xbf16>
    %cst_16 = arith.constant dense<0.000000e+00> : vector<16x128xf32>
    %41 = tpu.matmul %39, %40, %cst_16 {dimension_numbers = #tpu.dot_dimension_numbers<[1], [0], [0], [1], [0, 0, 1, 1], [], []>} : vector<16x128xbf16>, vector<128x128xbf16>, vector<16x128xf32> -> vector<16x128xf32>
    %c0_17 = arith.constant 0 : index
    %c0_18 = arith.constant 0 : index
    %42 = vector.load %arg6[%c0_17, %c0_18] : memref<1x128xf32, #tpu.memory_space<vmem>>, vector<1x128xf32>
    %43 = vector.broadcast %42 : vector<1x128xf32> to vector<16x128xf32>
    %44 = arith.addf %41, %43 : vector<16x128xf32>
    %45 = arith.addf %2, %44 : vector<16x128xf32>
    %46 = vector.broadcast %8 : vector<1x128xf32> to vector<16x128xf32>
    %47 = arith.mulf %45, %46 : vector<16x128xf32>
    %cst_19 = arith.constant dense<0.000000e+00> : vector<16xf32>
    %48 = vector.multi_reduction <add>, %47, %cst_19 [1] : vector<16x128xf32> to vector<16xf32>
    %49 = vector.shape_cast %48 : vector<16xf32> to vector<16x1xf32>
    %cst_20 = arith.constant 3.125000e-02 : f32
    %50 = vector.broadcast %cst_20 : f32 to vector<16x1xf32>
    %51 = arith.mulf %49, %50 : vector<16x1xf32>
    %52 = vector.broadcast %51 : vector<16x1xf32> to vector<16x128xf32>
    %53 = arith.subf %45, %52 : vector<16x128xf32>
    %54 = vector.broadcast %8 : vector<1x128xf32> to vector<16x128xf32>
    %55 = arith.mulf %53, %54 : vector<16x128xf32>
    %56 = arith.mulf %55, %55 : vector<16x128xf32>
    %cst_21 = arith.constant dense<0.000000e+00> : vector<16xf32>
    %57 = vector.multi_reduction <add>, %56, %cst_21 [1] : vector<16x128xf32> to vector<16xf32>
    %58 = vector.shape_cast %57 : vector<16xf32> to vector<16x1xf32>
    %cst_22 = arith.constant 3.125000e-02 : f32
    %59 = vector.broadcast %cst_22 : f32 to vector<16x1xf32>
    %60 = arith.mulf %58, %59 : vector<16x1xf32>
    %cst_23 = arith.constant 9.99999996E-13 : f32
    %61 = vector.broadcast %cst_23 : f32 to vector<16x1xf32>
    %62 = arith.addf %60, %61 : vector<16x1xf32>
    %63 = math.rsqrt %62 : vector<16x1xf32>
    %64 = vector.broadcast %63 : vector<16x1xf32> to vector<16x128xf32>
    %65 = arith.mulf %55, %64 : vector<16x128xf32>
    %c0_24 = arith.constant 0 : index
    %c0_25 = arith.constant 0 : index
    %66 = vector.load %arg7[%c0_24, %c0_25] : memref<1x128xf32, #tpu.memory_space<vmem>>, vector<1x128xf32>
    %67 = vector.broadcast %66 : vector<1x128xf32> to vector<16x128xf32>
    %68 = arith.mulf %65, %67 : vector<16x128xf32>
    %c0_26 = arith.constant 0 : index
    %c0_27 = arith.constant 0 : index
    %69 = vector.load %arg8[%c0_26, %c0_27] : memref<1x128xf32, #tpu.memory_space<vmem>>, vector<1x128xf32>
    %70 = vector.broadcast %69 : vector<1x128xf32> to vector<16x128xf32>
    %71 = arith.addf %68, %70 : vector<16x128xf32>
    %72 = arith.truncf %71 : vector<16x128xf32> to vector<16x128xbf16>
    %c0_28 = arith.constant 0 : index
    %c0_29 = arith.constant 0 : index
    %73 = vector.load %arg9[%c0_28, %c0_29] : memref<128x128xbf16, #tpu.memory_space<vmem>>, vector<128x128xbf16>
    %cst_30 = arith.constant dense<0.000000e+00> : vector<16x128xf32>
    %74 = tpu.matmul %72, %73, %cst_30 {dimension_numbers = #tpu.dot_dimension_numbers<[1], [0], [0], [1], [0, 0, 1, 1], [], []>} : vector<16x128xbf16>, vector<128x128xbf16>, vector<16x128xf32> -> vector<16x128xf32>
    %c0_31 = arith.constant 0 : index
    %c0_32 = arith.constant 0 : index
    %75 = vector.load %arg10[%c0_31, %c0_32] : memref<1x128xf32, #tpu.memory_space<vmem>>, vector<1x128xf32>
    %76 = vector.broadcast %75 : vector<1x128xf32> to vector<16x128xf32>
    %77 = arith.addf %74, %76 : vector<16x128xf32>
    %cst_33 = arith.constant 5.000000e-01 : f32
    %78 = vector.broadcast %cst_33 : f32 to vector<16x128xf32>
    %79 = arith.mulf %78, %77 : vector<16x128xf32>
    %80 = arith.mulf %77, %77 : vector<16x128xf32>
    %cst_34 = arith.constant 0.0356774069 : f32
    %81 = vector.broadcast %cst_34 : f32 to vector<16x128xf32>
    %82 = arith.mulf %81, %80 : vector<16x128xf32>
    %cst_35 = arith.constant 0.797884583 : f32
    %83 = vector.broadcast %cst_35 : f32 to vector<16x128xf32>
    %84 = arith.addf %83, %82 : vector<16x128xf32>
    %85 = arith.mulf %77, %84 : vector<16x128xf32>
    %86 = math.tanh %85 : vector<16x128xf32>
    %cst_36 = arith.constant 1.000000e+00 : f32
    %87 = vector.broadcast %cst_36 : f32 to vector<16x128xf32>
    %88 = arith.addf %87, %86 : vector<16x128xf32>
    %89 = arith.mulf %79, %88 : vector<16x128xf32>
    %90 = arith.truncf %89 : vector<16x128xf32> to vector<16x128xbf16>
    %c0_37 = arith.constant 0 : index
    %c0_38 = arith.constant 0 : index
    %91 = vector.load %arg11[%c0_37, %c0_38] : memref<128x128xbf16, #tpu.memory_space<vmem>>, vector<128x128xbf16>
    %cst_39 = arith.constant dense<0.000000e+00> : vector<16x128xf32>
    %92 = tpu.matmul %90, %91, %cst_39 {dimension_numbers = #tpu.dot_dimension_numbers<[1], [0], [0], [1], [0, 0, 1, 1], [], []>} : vector<16x128xbf16>, vector<128x128xbf16>, vector<16x128xf32> -> vector<16x128xf32>
    %c0_40 = arith.constant 0 : index
    %c0_41 = arith.constant 0 : index
    %93 = vector.load %arg12[%c0_40, %c0_41] : memref<1x128xf32, #tpu.memory_space<vmem>>, vector<1x128xf32>
    %94 = vector.broadcast %93 : vector<1x128xf32> to vector<16x128xf32>
    %95 = arith.addf %92, %94 : vector<16x128xf32>
    %96 = arith.addf %71, %95 : vector<16x128xf32>
    %97 = vector.broadcast %8 : vector<1x128xf32> to vector<16x128xf32>
    %98 = arith.mulf %96, %97 : vector<16x128xf32>
    %cst_42 = arith.constant dense<0.000000e+00> : vector<16xf32>
    %99 = vector.multi_reduction <add>, %98, %cst_42 [1] : vector<16x128xf32> to vector<16xf32>
    %100 = vector.shape_cast %99 : vector<16xf32> to vector<16x1xf32>
    %cst_43 = arith.constant 3.125000e-02 : f32
    %101 = vector.broadcast %cst_43 : f32 to vector<16x1xf32>
    %102 = arith.mulf %100, %101 : vector<16x1xf32>
    %103 = vector.broadcast %102 : vector<16x1xf32> to vector<16x128xf32>
    %104 = arith.subf %96, %103 : vector<16x128xf32>
    %105 = vector.broadcast %8 : vector<1x128xf32> to vector<16x128xf32>
    %106 = arith.mulf %104, %105 : vector<16x128xf32>
    %107 = arith.mulf %106, %106 : vector<16x128xf32>
    %cst_44 = arith.constant dense<0.000000e+00> : vector<16xf32>
    %108 = vector.multi_reduction <add>, %107, %cst_44 [1] : vector<16x128xf32> to vector<16xf32>
    %109 = vector.shape_cast %108 : vector<16xf32> to vector<16x1xf32>
    %cst_45 = arith.constant 3.125000e-02 : f32
    %110 = vector.broadcast %cst_45 : f32 to vector<16x1xf32>
    %111 = arith.mulf %109, %110 : vector<16x1xf32>
    %cst_46 = arith.constant 9.99999996E-13 : f32
    %112 = vector.broadcast %cst_46 : f32 to vector<16x1xf32>
    %113 = arith.addf %111, %112 : vector<16x1xf32>
    %114 = math.rsqrt %113 : vector<16x1xf32>
    %115 = vector.broadcast %114 : vector<16x1xf32> to vector<16x128xf32>
    %116 = arith.mulf %106, %115 : vector<16x128xf32>
    %c0_47 = arith.constant 0 : index
    %c0_48 = arith.constant 0 : index
    %117 = vector.load %arg13[%c0_47, %c0_48] : memref<1x128xf32, #tpu.memory_space<vmem>>, vector<1x128xf32>
    %118 = vector.broadcast %117 : vector<1x128xf32> to vector<16x128xf32>
    %119 = arith.mulf %116, %118 : vector<16x128xf32>
    %c0_49 = arith.constant 0 : index
    %c0_50 = arith.constant 0 : index
    %120 = vector.load %arg14[%c0_49, %c0_50] : memref<1x128xf32, #tpu.memory_space<vmem>>, vector<1x128xf32>
    %121 = vector.broadcast %120 : vector<1x128xf32> to vector<16x128xf32>
    %122 = arith.addf %119, %121 : vector<16x128xf32>
    %123 = vector.shape_cast %122 : vector<16x128xf32> to vector<2x8x128xf32>
    %124 = arith.truncf %123 : vector<2x8x128xf32> to vector<2x8x128xbf16>
    %c0_51 = arith.constant 0 : index
    %c0_52 = arith.constant 0 : index
    %c0_53 = arith.constant 0 : index
    %125 = vector.load %arg15[%c0_51, %c0_52, %c0_53] : memref<2x8x128xbf16, #tpu.memory_space<vmem>>, vector<2x8x128xbf16>
    tpu.vector_store %arg15[%c0_51, %c0_52, %c0_53], %124 {strides = array<i32>} : memref<2x8x128xbf16, #tpu.memory_space<vmem>>, vector<2x8x128xbf16>,
    return
  }
  func.func @transform_0(%arg0: i32) -> (i32, i32, i32) {
    %c0_i32 = arith.constant 0 : i32
    %c0_i32_0 = arith.constant 0 : i32
    %c0_i32_1 = arith.constant 0 : i32
    return %arg0, %c0_i32, %c0_i32_0 : i32, i32, i32
  }
  func.func @transform_1(%arg0: i32) -> (i32, i32, i32) {
    %c0_i32 = arith.constant 0 : i32
    %c0_i32_0 = arith.constant 0 : i32
    %c0_i32_1 = arith.constant 0 : i32
    return %arg0, %c0_i32, %c0_i32_0 : i32, i32, i32
  }
  func.func @transform_2(%arg0: i32) -> (i32, i32) {
    %c0_i32 = arith.constant 0 : i32
    %c0_i32_0 = arith.constant 0 : i32
    %c0_i32_1 = arith.constant 0 : i32
    return %c0_i32, %c0_i32_0 : i32, i32
  }
  func.func @transform_3(%arg0: i32) -> (i32, i32) {
    %c0_i32 = arith.constant 0 : i32
    %c0_i32_0 = arith.constant 0 : i32
    %c0_i32_1 = arith.constant 0 : i32
    return %c0_i32, %c0_i32_0 : i32, i32
  }
  func.func @transform_4(%arg0: i32) -> (i32, i32) {
    %c0_i32 = arith.constant 0 : i32
    %c0_i32_0 = arith.constant 0 : i32
    %c0_i32_1 = arith.constant 0 : i32
    return %c0_i32, %c0_i32_0 : i32, i32
  }
  func.func @transform_5(%arg0: i32) -> (i32, i32) {
    %c0_i32 = arith.constant 0 : i32
    %c0_i32_0 = arith.constant 0 : i32
    %c0_i32_1 = arith.constant 0 : i32
    return %c0_i32, %c0_i32_0 : i32, i32
  }
  func.func @transform_6(%arg0: i32) -> (i32, i32) {
    %c0_i32 = arith.constant 0 : i32
    %c0_i32_0 = arith.constant 0 : i32
    %c0_i32_1 = arith.constant 0 : i32
    return %c0_i32, %c0_i32_0 : i32, i32
  }
  func.func @transform_7(%arg0: i32) -> (i32, i32) {
    %c0_i32 = arith.constant 0 : i32
    %c0_i32_0 = arith.constant 0 : i32
    %c0_i32_1 = arith.constant 0 : i32
    return %c0_i32, %c0_i32_0 : i32, i32
  }
  func.func @transform_8(%arg0: i32) -> (i32, i32) {
    %c0_i32 = arith.constant 0 : i32
    %c0_i32_0 = arith.constant 0 : i32
    %c0_i32_1 = arith.constant 0 : i32
    return %c0_i32, %c0_i32_0 : i32, i32
  }
  func.func @transform_9(%arg0: i32) -> (i32, i32) {
    %c0_i32 = arith.constant 0 : i32
    %c0_i32_0 = arith.constant 0 : i32
    %c0_i32_1 = arith.constant 0 : i32
    return %c0_i32, %c0_i32_0 : i32, i32
  }
  func.func @transform_10(%arg0: i32) -> (i32, i32) {
    %c0_i32 = arith.constant 0 : i32
    %c0_i32_0 = arith.constant 0 : i32
    %c0_i32_1 = arith.constant 0 : i32
    return %c0_i32, %c0_i32_0 : i32, i32
  }
  func.func @transform_11(%arg0: i32) -> (i32, i32) {
    %c0_i32 = arith.constant 0 : i32
    %c0_i32_0 = arith.constant 0 : i32
    %c0_i32_1 = arith.constant 0 : i32
    return %c0_i32, %c0_i32_0 : i32, i32
  }
  func.func @transform_12(%arg0: i32) -> (i32, i32) {
    %c0_i32 = arith.constant 0 : i32
    %c0_i32_0 = arith.constant 0 : i32
    %c0_i32_1 = arith.constant 0 : i32
    return %c0_i32, %c0_i32_0 : i32, i32
  }
  func.func @transform_13(%arg0: i32) -> (i32, i32) {
    %c0_i32 = arith.constant 0 : i32
    %c0_i32_0 = arith.constant 0 : i32
    %c0_i32_1 = arith.constant 0 : i32
    return %c0_i32, %c0_i32_0 : i32, i32
  }
  func.func @transform_14(%arg0: i32) -> (i32, i32, i32) {
    %c0_i32 = arith.constant 0 : i32
    %c0_i32_0 = arith.constant 0 : i32
    %c0_i32_1 = arith.constant 0 : i32
    return %arg0, %c0_i32, %c0_i32_0 : i32, i32, i32
  }
}

</mosaic_0001>

<llo_original>
// kernel: tpu_custom_call.1
$region0: #{tpu_custom_call.1}
  #allocation0 [shape = 'u32[]', space=smem, size = 0x4, offset = 0x4, fixed_abs, tag = 'smem constant byte address 0x4 - core index']
  #allocation1 [shape = 'u32[144,128]{1,0:T(1,128)}', space=vmem, size = 0x12000, scoped, tag = 'internal scratch']
  %s0 = inlined_call_operand.hbm [shape: bf16[2,8,128], index: 0, kind: input, shape index: {}]
  %s1 = inlined_call_operand.vmem [shape: f32[2,1,8], index: 1, kind: input, shape index: {}]
  %s2 = inlined_call_operand.hbm [shape: bf16[128,384], index: 2, kind: input, shape index: {}]
  %s3 = inlined_call_operand.vmem [shape: f32[1,384], index: 3, kind: input, shape index: {}]
  %s4 = inlined_call_operand.hbm [shape: bf16[128,128], index: 4, kind: input, shape index: {}]
  %s5 = inlined_call_operand.vmem [shape: f32[1,128], index: 5, kind: input, shape index: {}]
  %s6 = inlined_call_operand.vmem [shape: f32[1,128], index: 6, kind: input, shape index: {}]
  %s7 = inlined_call_operand.vmem [shape: f32[1,128], index: 7, kind: input, shape index: {}]
  %s8 = inlined_call_operand.hbm [shape: bf16[128,128], index: 8, kind: input, shape index: {}]
  %s9 = inlined_call_operand.vmem [shape: f32[1,128], index: 9, kind: input, shape index: {}]
  %s10 = inlined_call_operand.hbm [shape: bf16[128,128], index: 10, kind: input, shape index: {}]
  %s11 = inlined_call_operand.vmem [shape: f32[1,128], index: 11, kind: input, shape index: {}]
  %s12 = inlined_call_operand.vmem [shape: f32[1,128], index: 12, kind: input, shape index: {}]
  %s13 = inlined_call_operand.vmem [shape: f32[1,128], index: 13, kind: input, shape index: {}]
  %s14 = inlined_call_operand.hbm [shape: bf16[2,8,128], index: 14, kind: output, shape index: {}]
  %s15 = sld [smem:[#allocation0]]
  $region86: #{tpu_custom_call.1} parent=0
    _
  %s17 = ssub.s32 1, %s15
  %s18 = scalar_select 0, %s17, %s15
  $region1: #{tpu_custom_call.1} parent=0
    #allocation2 [shape = 'u8[4096]{0}', space=vmem, size = 0x1000, scoped, tag = 'input window, operand 0, single buffered']
    #allocation3 [shape = 's32[1]{0}', space=sflag, size = 0x4, scoped, tag = 'scoped memory for tpu_custom_call.1']
    #allocation4 [shape = 's32[1]{0}', space=sflag, size = 0x4, scoped, tag = 'scoped memory for tpu_custom_call.1']
    #allocation5 [shape = 'u8[98304]{0}', space=vmem, size = 0x18000, scoped, tag = 'input window, operand 2, single buffered']
    #allocation6 [shape = 's32[1]{0}', space=sflag, size = 0x4, scoped, tag = 'scoped memory for tpu_custom_call.1']
    #allocation7 [shape = 'u8[32768]{0}', space=vmem, size = 0x8000, scoped, tag = 'input window, operand 4, single buffered']
    #allocation8 [shape = 'u8[32768]{0}', space=vmem, size = 0x8000, scoped, tag = 'input window, operand 8, single buffered']
    #allocation9 [shape = 's32[1]{0}', space=sflag, size = 0x4, scoped, tag = 'scoped memory for tpu_custom_call.1']
    #allocation10 [shape = 'u8[32768]{0}', space=vmem, size = 0x8000, scoped, tag = 'input window, operand 10, single buffered']
    #allocation11 [shape = 'u8[4096]{0}', space=vmem, size = 0x1000, scoped, tag = 'output window, operand 0, single buffered']
    %19 = vsyncpa [#allocation3], 0
    %20 = vsyncpa [#allocation6], 0
    %21 = vsyncpa [#allocation9], 0
    %22 = vsyncpa [#allocation4], 0
    // Predicated region
    $region2: #{tpu_custom_call.1} parent=1 // pred_check
      _
    $region3: #{tpu_custom_call.1} parent=1 // pred_check_branch
      %24 = sbr.rel (0) target = $region5
    $region4: #{tpu_custom_call.1} parent=1 // pred_region
      %s26 = ssub.s32 128, 128
      %27 = vsyncadd [#allocation3], %s26
      %s28 = sshll.u32 [#allocation2], 4
      %s29 = int_to_ptr.vmem [resolvable:$true] %s28
      %34 = dma.hbm_to_vmem [thread:$0]  %s0, 128, %s29, [#allocation3], 64, 64, 4
    $region5: #{tpu_custom_call.1} parent=1 // pred_fallthru
      _
    // Predicated region
    $region6: #{tpu_custom_call.1} parent=1 // pred_check
      _
    $region7: #{tpu_custom_call.1} parent=1 // pred_check_branch
      %36 = sbr.rel (0) target = $region9
    $region8: #{tpu_custom_call.1} parent=1 // pred_region
      _
    $region9: #{tpu_custom_call.1} parent=1 // pred_fallthru
      _
    // Predicated region
    $region10: #{tpu_custom_call.1} parent=1 // pred_check
      _
    $region11: #{tpu_custom_call.1} parent=1 // pred_check_branch
      %38 = sbr.rel (0) target = $region13
    $region12: #{tpu_custom_call.1} parent=1 // pred_region
      %s40 = ssub.s32 3072, 3072
      %41 = vsyncadd [#allocation6], %s40
      %s42 = sshll.u32 [#allocation5], 4
      %s43 = int_to_ptr.vmem [resolvable:$true] %s42
      %48 = dma.hbm_to_vmem [thread:$0]  %s2, 3072, %s43, [#allocation6], 192, 192, 12
    $region13: #{tpu_custom_call.1} parent=1 // pred_fallthru
      _
    // Predicated region
    $region14: #{tpu_custom_call.1} parent=1 // pred_check
      _
    $region15: #{tpu_custom_call.1} parent=1 // pred_check_branch
      %50 = sbr.rel (0) target = $region17
    $region16: #{tpu_custom_call.1} parent=1 // pred_region
      _
    $region17: #{tpu_custom_call.1} parent=1 // pred_fallthru
      _
    // Predicated region
    $region18: #{tpu_custom_call.1} parent=1 // pred_check
      _
    $region19: #{tpu_custom_call.1} parent=1 // pred_check_branch
      %52 = sbr.rel (0) target = $region21
    $region20: #{tpu_custom_call.1} parent=1 // pred_region
      %s54 = ssub.s32 1024, 1024
      %55 = vsyncadd [#allocation6], %s54
      %s56 = sshll.u32 [#allocation7], 4
      %s57 = int_to_ptr.vmem [resolvable:$true] %s56
      %62 = dma.hbm_to_vmem [thread:$0]  %s4, 1024, %s57, [#allocation6], 64, 64, 4
    $region21: #{tpu_custom_call.1} parent=1 // pred_fallthru
      _
    // Predicated region
    $region22: #{tpu_custom_call.1} parent=1 // pred_check
      _
    $region23: #{tpu_custom_call.1} parent=1 // pred_check_branch
      %64 = sbr.rel (0) target = $region25
    $region24: #{tpu_custom_call.1} parent=1 // pred_region
      _
    $region25: #{tpu_custom_call.1} parent=1 // pred_fallthru
      _
    // Predicated region
    $region26: #{tpu_custom_call.1} parent=1 // pred_check
      _
    $region27: #{tpu_custom_call.1} parent=1 // pred_check_branch
      %66 = sbr.rel (0) target = $region29
    $region28: #{tpu_custom_call.1} parent=1 // pred_region
      _
    $region29: #{tpu_custom_call.1} parent=1 // pred_fallthru
      _
    // Predicated region
    $region30: #{tpu_custom_call.1} parent=1 // pred_check
      _
    $region31: #{tpu_custom_call.1} parent=1 // pred_check_branch
      %68 = sbr.rel (0) target = $region33
    $region32: #{tpu_custom_call.1} parent=1 // pred_region
      _
    $region33: #{tpu_custom_call.1} parent=1 // pred_fallthru
      _
    // Predicated region
    $region34: #{tpu_custom_call.1} parent=1 // pred_check
      _
    $region35: #{tpu_custom_call.1} parent=1 // pred_check_branch
      %70 = sbr.rel (0) target = $region37
    $region36: #{tpu_custom_call.1} parent=1 // pred_region
      %s72 = ssub.s32 1024, 1024
      %73 = vsyncadd [#allocation9], %s72
      %s74 = sshll.u32 [#allocation8], 4
      %s75 = int_to_ptr.vmem [resolvable:$true] %s74
      %80 = dma.hbm_to_vmem [thread:$0]  %s8, 1024, %s75, [#allocation9], 64, 64, 4
    $region37: #{tpu_custom_call.1} parent=1 // pred_fallthru
      _
    // Predicated region
    $region38: #{tpu_custom_call.1} parent=1 // pred_check
      _
    $region39: #{tpu_custom_call.1} parent=1 // pred_check_branch
      %82 = sbr.rel (0) target = $region41
    $region40: #{tpu_custom_call.1} parent=1 // pred_region
      _
    $region41: #{tpu_custom_call.1} parent=1 // pred_fallthru
      _
    // Predicated region
    $region42: #{tpu_custom_call.1} parent=1 // pred_check
      _
    $region43: #{tpu_custom_call.1} parent=1 // pred_check_branch
      %84 = sbr.rel (0) target = $region45
    $region44: #{tpu_custom_call.1} parent=1 // pred_region
      %s86 = ssub.s32 1024, 1024
      %87 = vsyncadd [#allocation9], %s86
      %s88 = sshll.u32 [#allocation10], 4
      %s89 = int_to_ptr.vmem [resolvable:$true] %s88
      %94 = dma.hbm_to_vmem [thread:$0]  %s10, 1024, %s89, [#allocation9], 64, 64, 4
    $region45: #{tpu_custom_call.1} parent=1 // pred_fallthru
      _
    // Predicated region
    $region46: #{tpu_custom_call.1} parent=1 // pred_check
      _
    $region47: #{tpu_custom_call.1} parent=1 // pred_check_branch
      %96 = sbr.rel (0) target = $region49
    $region48: #{tpu_custom_call.1} parent=1 // pred_region
      _
    $region49: #{tpu_custom_call.1} parent=1 // pred_fallthru
      _
    // Predicated region
    $region50: #{tpu_custom_call.1} parent=1 // pred_check
      _
    $region51: #{tpu_custom_call.1} parent=1 // pred_check_branch
      %98 = sbr.rel (0) target = $region53
    $region52: #{tpu_custom_call.1} parent=1 // pred_region
      _
    $region53: #{tpu_custom_call.1} parent=1 // pred_fallthru
      _
    // Predicated region
    $region54: #{tpu_custom_call.1} parent=1 // pred_check
      _
    $region55: #{tpu_custom_call.1} parent=1 // pred_check_branch
      %100 = sbr.rel (0) target = $region57
    $region56: #{tpu_custom_call.1} parent=1 // pred_region
      _
    $region57: #{tpu_custom_call.1} parent=1 // pred_fallthru
      _
    // Predicated region
    $region58: #{tpu_custom_call.1} parent=1 // pred_check
      _
    $region59: #{tpu_custom_call.1} parent=1 // pred_check_branch
      %102 = sbr.rel (0) target = $region61
    $region60: #{tpu_custom_call.1} parent=1 // pred_region
      %103 = dma.done [#allocation3], 128
    $region61: #{tpu_custom_call.1} parent=1 // pred_fallthru
      _
    // Predicated region
    $region62: #{tpu_custom_call.1} parent=1 // pred_check
      _
    $region63: #{tpu_custom_call.1} parent=1 // pred_check_branch
      %105 = sbr.rel (0) target = $region65
    $region64: #{tpu_custom_call.1} parent=1 // pred_region
      %106 = dma.done [#allocation6], 3072
    $region65: #{tpu_custom_call.1} parent=1 // pred_fallthru
      _
    // Predicated region
    $region66: #{tpu_custom_call.1} parent=1 // pred_check
      _
    $region67: #{tpu_custom_call.1} parent=1 // pred_check_branch
      %108 = sbr.rel (0) target = $region69
    $region68: #{tpu_custom_call.1} parent=1 // pred_region
      %109 = dma.done [#allocation6], 1024
    $region69: #{tpu_custom_call.1} parent=1 // pred_fallthru
      _
    // Predicated region
    $region70: #{tpu_custom_call.1} parent=1 // pred_check
      _
    $region71: #{tpu_custom_call.1} parent=1 // pred_check_branch
      %111 = sbr.rel (0) target = $region73
    $region72: #{tpu_custom_call.1} parent=1 // pred_region
      %112 = dma.done [#allocation9], 1024
    $region73: #{tpu_custom_call.1} parent=1 // pred_fallthru
      _
    // Predicated region
    $region74: #{tpu_custom_call.1} parent=1 // pred_check
      _
    $region75: #{tpu_custom_call.1} parent=1 // pred_check_branch
      %114 = sbr.rel (0) target = $region77
    $region76: #{tpu_custom_call.1} parent=1 // pred_region
      %115 = dma.done [#allocation9], 1024
    $region77: #{tpu_custom_call.1} parent=1 // pred_fallthru
      _
    %v117 = vld [vmem:[#allocation2] sm:$0xf]
    %v118 = vld [vmem:[#allocation2 + $0x4] sm:$0xf]
    %v119 = vunpack.c.l.bf16 %v117
    %v120 = vunpack.c.l.bf16 %v118
    %v121 = vld [vmem:[%s1] sm:$0x1]
    %v122 = vld [vmem:[%s1 + $0x1] sm:$0x1]
    %v123 = vlaneseq
    %v124 = vand.u32 %v123, 127
    %vm125 = vcmp.lt.s32.totalorder %v124, 32
    %v126 = vsel %vm125, 1, 0
    %v127 = vcvt.s32.f32 %v126
    %v128 = vld [vmem:[#allocation5] sm:$0xff]
    %v129 = vld [vmem:[#allocation5 + $0x8] sm:$0xf]
    %v130 = vld [vmem:[#allocation5 + $0xc] sm:$0xff]
    %v131 = vld [vmem:[#allocation5 + $0x14] sm:$0xf]
    %v132 = vld [vmem:[#allocation5 + $0x18] sm:$0xff]
    %v133 = vld [vmem:[#allocation5 + $0x20] sm:$0xf]
    %v134 = vld [vmem:[#allocation5 + $0x24] sm:$0xff]
    %v135 = vld [vmem:[#allocation5 + $0x2c] sm:$0xf]
    %v136 = vld [vmem:[#allocation5 + $0x30] sm:$0xff]
    %v137 = vld [vmem:[#allocation5 + $0x38] sm:$0xf]
    %v138 = vld [vmem:[#allocation5 + $0x3c] sm:$0xff]
    %v139 = vld [vmem:[#allocation5 + $0x44] sm:$0xf]
    %v140 = vld [vmem:[#allocation5 + $0x48] sm:$0xff]
    %v141 = vld [vmem:[#allocation5 + $0x50] sm:$0xf]
    %v142 = vld [vmem:[#allocation5 + $0x54] sm:$0xff]
    %v143 = vld [vmem:[#allocation5 + $0x5c] sm:$0xf]
    %v144 = vld [vmem:[#allocation5 + $0x60] sm:$0xff]
    %v145 = vld [vmem:[#allocation5 + $0x68] sm:$0xf]
    %v146 = vld [vmem:[#allocation5 + $0x6c] sm:$0xff]
    %v147 = vld [vmem:[#allocation5 + $0x74] sm:$0xf]
    %v148 = vld [vmem:[#allocation5 + $0x78] sm:$0xff]
    %v149 = vld [vmem:[#allocation5 + $0x80] sm:$0xf]
    %v150 = vld [vmem:[#allocation5 + $0x84] sm:$0xff]
    %v151 = vld [vmem:[#allocation5 + $0x8c] sm:$0xf]
    %v152 = vld [vmem:[#allocation5 + $0x90] sm:$0xff]
    %v153 = vld [vmem:[#allocation5 + $0x98] sm:$0xf]
    %v154 = vld [vmem:[#allocation5 + $0x9c] sm:$0xff]
    %v155 = vld [vmem:[#allocation5 + $0xa4] sm:$0xf]
    %v156 = vld [vmem:[#allocation5 + $0xa8] sm:$0xff]
    %v157 = vld [vmem:[#allocation5 + $0xb0] sm:$0xf]
    %v158 = vld [vmem:[#allocation5 + $0xb4] sm:$0xff]
    %v159 = vld [vmem:[#allocation5 + $0xbc] sm:$0xf]
    %v160 = vld [vmem:[%s3] sm:$0x7]
    %v162 = vlaneseq
    %v163 = vshrl.u32 %v162, 7
    %v164 = vsub.s32 0, %v163
    %v165 = vrot.slane %v160, %v164
    %v166 = vlaneseq
    %v167 = vshrl.u32 %v166, 7
    %v168 = vsub.s32 1, %v167
    %v169 = vrot.slane %v160, %v168
    %v170 = vlaneseq
    %v171 = vshrl.u32 %v170, 7
    %v172 = vsub.s32 2, %v171
    %v173 = vrot.slane %v160, %v172
    %v179 = vunpack.c.l.b16 %v117
    %v180 = vunpack.c.l.b16 %v118
    %v181 = vpack.c.b16 %v180, %v179
    %v215 = vunpack.c.l.b16 %v128
    %v216 = vunpack.c.h.b16 %v128
    %v217 = vunpack.c.l.b16 %v129
    %v218 = vunpack.c.l.b16 %v130
    %v219 = vunpack.c.h.b16 %v130
    %v220 = vunpack.c.l.b16 %v131
    %v221 = vunpack.c.l.b16 %v132
    %v222 = vunpack.c.h.b16 %v132
    %v223 = vunpack.c.l.b16 %v133
    %v224 = vunpack.c.l.b16 %v134
    %v225 = vunpack.c.h.b16 %v134
    %v226 = vunpack.c.l.b16 %v135
    %v227 = vunpack.c.l.b16 %v136
    %v228 = vunpack.c.h.b16 %v136
    %v229 = vunpack.c.l.b16 %v137
    %v230 = vunpack.c.l.b16 %v138
    %v231 = vunpack.c.h.b16 %v138
    %v232 = vunpack.c.l.b16 %v139
    %v233 = vunpack.c.l.b16 %v140
    %v234 = vunpack.c.h.b16 %v140
    %v235 = vunpack.c.l.b16 %v141
    %v236 = vunpack.c.l.b16 %v142
    %v237 = vunpack.c.h.b16 %v142
    %v238 = vunpack.c.l.b16 %v143
    %v239 = vunpack.c.l.b16 %v144
    %v240 = vunpack.c.h.b16 %v144
    %v241 = vunpack.c.l.b16 %v145
    %v242 = vunpack.c.l.b16 %v146
    %v243 = vunpack.c.h.b16 %v146
    %v244 = vunpack.c.l.b16 %v147
    %v245 = vunpack.c.l.b16 %v148
    %v246 = vunpack.c.h.b16 %v148
    %v247 = vunpack.c.l.b16 %v149
    %v248 = vunpack.c.l.b16 %v150
    %v249 = vunpack.c.h.b16 %v150
    %v250 = vunpack.c.l.b16 %v151
    %v251 = vunpack.c.l.b16 %v152
    %v252 = vunpack.c.h.b16 %v152
    %v253 = vunpack.c.l.b16 %v153
    %v254 = vunpack.c.l.b16 %v154
    %v255 = vunpack.c.h.b16 %v154
    %v256 = vunpack.c.l.b16 %v155
    %v257 = vunpack.c.l.b16 %v156
    %v258 = vunpack.c.h.b16 %v156
    %v259 = vunpack.c.l.b16 %v157
    %v260 = vunpack.c.l.b16 %v158
    %v261 = vunpack.c.h.b16 %v158
    %v262 = vunpack.c.l.b16 %v159
    %v263 = vpack.c.b16 %v218, %v215
    %v264 = vpack.c.b16 %v219, %v216
    %v265 = vpack.c.b16 %v220, %v217
    %v266 = vpack.c.b16 %v224, %v221
    %v267 = vpack.c.b16 %v225, %v222
    %v268 = vpack.c.b16 %v226, %v223
    %v269 = vpack.c.b16 %v230, %v227
    %v270 = vpack.c.b16 %v231, %v228
    %v271 = vpack.c.b16 %v232, %v229
    %v272 = vpack.c.b16 %v236, %v233
    %v273 = vpack.c.b16 %v237, %v234
    %v274 = vpack.c.b16 %v238, %v235
    %v275 = vpack.c.b16 %v242, %v239
    %v276 = vpack.c.b16 %v243, %v240
    %v277 = vpack.c.b16 %v244, %v241
    %v278 = vpack.c.b16 %v248, %v245
    %v279 = vpack.c.b16 %v249, %v246
    %v280 = vpack.c.b16 %v250, %v247
    %v281 = vpack.c.b16 %v254, %v251
    %v282 = vpack.c.b16 %v255, %v252
    %v283 = vpack.c.b16 %v256, %v253
    %v284 = vpack.c.b16 %v260, %v257
    %v285 = vpack.c.b16 %v261, %v258
    %v286 = vpack.c.b16 %v262, %v259
    %311 = vmatprep.subr.bf16.mxu0 %v264
    %312 = vmatpush1.bf16.msra.mxu0 %v263
    %313 = vmatprep.subr.bf16.mxu0 %v267
    %314 = vmatpush1.bf16.msra.mxu0 %v266
    %315 = vmatprep.subr.bf16.mxu0 %v270
    %316 = vmatpush1.bf16.msra.mxu0 %v269
    %317 = vmatprep.subr.bf16.mxu0 %v273
    %318 = vmatpush1.bf16.msra.mxu0 %v272
    %319 = vmatprep.subr.bf16.mxu0 %v276
    %320 = vmatpush1.bf16.msra.mxu0 %v275
    %321 = vmatprep.subr.bf16.mxu0 %v279
    %322 = vmatpush1.bf16.msra.mxu0 %v278
    %323 = vmatprep.subr.bf16.mxu0 %v282
    %324 = vmatpush1.bf16.msra.mxu0 %v281
    %325 = vmatprep.subr.bf16.mxu0 %v285
    %326 = vmatpush1.bf16.msra.mxu0 %v284
    %327 = vmatprep.subr.bf16.mxu0 0
    %328 = vmatpush1.bf16.msra.mxu0 0
    %329 = vmatprep.subr.bf16.mxu0 0
    %330 = vmatpush1.bf16.msra.mxu0 0
    %331 = vmatprep.subr.bf16.mxu0 0
    %332 = vmatpush1.bf16.msra.mxu0 0
    %333 = vmatprep.subr.bf16.mxu0 0
    %334 = vmatpush1.bf16.msra.mxu0 0
    %335 = vmatprep.subr.bf16.mxu0 0
    %336 = vmatpush1.bf16.msra.mxu0 0
    %337 = vmatprep.subr.bf16.mxu0 0
    %338 = vmatpush1.bf16.msra.mxu0 0
    %339 = vmatprep.subr.bf16.mxu0 0
    %340 = vmatpush1.bf16.msra.mxu0 0
    %341 = vmatprep.subr.bf16.mxu0 0
    %342 = vmatpush1.bf16.msra.mxu0 0
    %343 = vmatprep.mubr.bf16.mxu0 0
    %344 = vmatmul.mubr.bf16.gmra.mrb[0].mxu0 %v181
    %v345 = vpop.f32.mrb[0].mxu0
    %v346 = vadd.f32 %v165, %v345
    %v347 = vpop.f32.mrb[0].mxu0
    %v348 = vadd.f32 %v169, %v347
    %v349 = vpop.f32.mrb[0].mxu0
    %v350 = vadd.f32 %v165, %v349
    %v351 = vpop.f32.mrb[0].mxu0
    %v352 = vadd.f32 %v169, %v351
    %353 = vdwg.mxu0
    %354 = vmatprep.subr.bf16.mxu0 0
    %355 = vmatpush1.bf16.msra.mxu0 %v265
    %356 = vmatprep.subr.bf16.mxu0 0
    %357 = vmatpush1.bf16.msra.mxu0 %v268
    %358 = vmatprep.subr.bf16.mxu0 0
    %359 = vmatpush1.bf16.msra.mxu0 %v271
    %360 = vmatprep.subr.bf16.mxu0 0
    %361 = vmatpush1.bf16.msra.mxu0 %v274
    %362 = vmatprep.subr.bf16.mxu0 0
    %363 = vmatpush1.bf16.msra.mxu0 %v277
    %364 = vmatprep.subr.bf16.mxu0 0
    %365 = vmatpush1.bf16.msra.mxu0 %v280
    %366 = vmatprep.subr.bf16.mxu0 0
    %367 = vmatpush1.bf16.msra.mxu0 %v283
    %368 = vmatprep.subr.bf16.mxu0 0
    %369 = vmatpush1.bf16.msra.mxu0 %v286
    %370 = vmatprep.subr.bf16.mxu0 0
    %371 = vmatpush1.bf16.msra.mxu0 0
    %372 = vmatprep.subr.bf16.mxu0 0
    %373 = vmatpush1.bf16.msra.mxu0 0
    %374 = vmatprep.subr.bf16.mxu0 0
    %375 = vmatpush1.bf16.msra.mxu0 0
    %376 = vmatprep.subr.bf16.mxu0 0
    %377 = vmatpush1.bf16.msra.mxu0 0
    %378 = vmatprep.subr.bf16.mxu0 0
    %379 = vmatpush1.bf16.msra.mxu0 0
    %380 = vmatprep.subr.bf16.mxu0 0
    %381 = vmatpush1.bf16.msra.mxu0 0
    %382 = vmatprep.subr.bf16.mxu0 0
    %383 = vmatpush1.bf16.msra.mxu0 0
    %384 = vmatprep.subr.bf16.mxu0 0
    %385 = vmatpush1.bf16.msra.mxu0 0
    %386 = vmatprep.mubr.bf16.mxu0 0
    %387 = vmatmul.mubr.bf16.gmra.mrb[0].mxu0 %v181
    %v388 = vpop.f32.mrb[0].mxu0
    %v389 = vadd.f32 %v173, %v388
    %v390 = vpop.f32.mrb[0].mxu0
    %v391 = vpop.f32.mrb[0].mxu0
    %v392 = vadd.f32 %v173, %v391
    %v393 = vpop.f32.mrb[0].mxu0
    %394 = vdwg.mxu0
    %v395 = vpack.c.bf16 %v350, %v346
    %v396 = vpack.c.bf16 %v352, %v348
    %v397 = vpack.c.bf16 %v392, %v389
    %v399 = vunpack.c.l.b16 %v395
    %v400 = vunpack.c.h.b16 %v395
    %v401 = vpack.c.b16 %v399, %v399
    %v402 = vpack.c.b16 %v400, %v400
    %v406 = vunpack.c.l.b16 %v396
    %v407 = vunpack.c.h.b16 %v396
    %v408 = vpack.c.b16 %v406, %v406
    %v409 = vpack.c.b16 %v407, %v407
    %v413 = vunpack.c.l.b16 %v397
    %v414 = vunpack.c.h.b16 %v397
    %v415 = vpack.c.b16 %v413, %v413
    %v416 = vpack.c.b16 %v414, %v414
    %417 = vmatprep.subr.bf16.mxu0 0
    %418 = vmatpush1.bf16.xpose.msra.mxu0 %v408
    %419 = vmatprep.subr.bf16.mxu0 0
    %420 = vmatpush1.bf16.xpose.msra.mxu0 0
    %421 = vmatprep.subr.bf16.mxu0 0
    %422 = vmatpush1.bf16.xpose.msra.mxu0 0
    %423 = vmatprep.subr.bf16.mxu0 0
    %424 = vmatpush1.bf16.xpose.msra.mxu0 0
    %425 = vmatprep.subr.bf16.mxu0 0
    %426 = vmatpush1.bf16.xpose.msra.mxu0 0
    %427 = vmatprep.subr.bf16.mxu0 0
    %428 = vmatpush1.bf16.xpose.msra.mxu0 0
    %429 = vmatprep.subr.bf16.mxu0 0
    %430 = vmatpush1.bf16.xpose.msra.mxu0 0
    %431 = vmatprep.subr.bf16.mxu0 0
    %432 = vmatpush1.bf16.xpose.msra.mxu0 0
    %433 = vmatprep.subr.bf16.mxu0 0
    %434 = vmatpush1.bf16.xpose.msra.mxu0 0
    %435 = vmatprep.subr.bf16.mxu0 0
    %436 = vmatpush1.bf16.xpose.msra.mxu0 0
    %437 = vmatprep.subr.bf16.mxu0 0
    %438 = vmatpush1.bf16.xpose.msra.mxu0 0
    %439 = vmatprep.subr.bf16.mxu0 0
    %440 = vmatpush1.bf16.xpose.msra.mxu0 0
    %441 = vmatprep.subr.bf16.mxu0 0
    %442 = vmatpush1.bf16.xpose.msra.mxu0 0
    %443 = vmatprep.subr.bf16.mxu0 0
    %444 = vmatpush1.bf16.xpose.msra.mxu0 0
    %445 = vmatprep.subr.bf16.mxu0 0
    %446 = vmatpush1.bf16.xpose.msra.mxu0 0
    %447 = vmatprep.subr.bf16.mxu0 0
    %448 = vmatpush1.bf16.xpose.msra.mxu0 0
    %449 = vmatprep.mubr.bf16.mxu0 0
    %450 = vmatmul.mubr.bf16.gmra.mrb[0].mxu0 %v401
    %v451 = vpop.f32.mrb[0].mxu0
    %v452 = vadd.f32 0.0, %v451
    %v453 = vpop.f32.mrb[0].mxu0
    %v454 = vpop.f32.mrb[0].mxu0
    %v455 = vpop.f32.mrb[0].mxu0
    %456 = vdwg.mxu0
    %457 = vmatprep.subr.bf16.mxu0 0
    %458 = vmatpush1.bf16.xpose.msra.mxu0 %v409
    %459 = vmatprep.subr.bf16.mxu0 0
    %460 = vmatpush1.bf16.xpose.msra.mxu0 0
    %461 = vmatprep.subr.bf16.mxu0 0
    %462 = vmatpush1.bf16.xpose.msra.mxu0 0
    %463 = vmatprep.subr.bf16.mxu0 0
    %464 = vmatpush1.bf16.xpose.msra.mxu0 0
    %465 = vmatprep.subr.bf16.mxu0 0
    %466 = vmatpush1.bf16.xpose.msra.mxu0 0
    %467 = vmatprep.subr.bf16.mxu0 0
    %468 = vmatpush1.bf16.xpose.msra.mxu0 0
    %469 = vmatprep.subr.bf16.mxu0 0
    %470 = vmatpush1.bf16.xpose.msra.mxu0 0
    %471 = vmatprep.subr.bf16.mxu0 0
    %472 = vmatpush1.bf16.xpose.msra.mxu0 0
    %473 = vmatprep.subr.bf16.mxu0 0
    %474 = vmatpush1.bf16.xpose.msra.mxu0 0
    %475 = vmatprep.subr.bf16.mxu0 0
    %476 = vmatpush1.bf16.xpose.msra.mxu0 0
    %477 = vmatprep.subr.bf16.mxu0 0
    %478 = vmatpush1.bf16.xpose.msra.mxu0 0
    %479 = vmatprep.subr.bf16.mxu0 0
    %480 = vmatpush1.bf16.xpose.msra.mxu0 0
    %481 = vmatprep.subr.bf16.mxu0 0
    %482 = vmatpush1.bf16.xpose.msra.mxu0 0
    %483 = vmatprep.subr.bf16.mxu0 0
    %484 = vmatpush1.bf16.xpose.msra.mxu0 0
    %485 = vmatprep.subr.bf16.mxu0 0
    %486 = vmatpush1.bf16.xpose.msra.mxu0 0
    %487 = vmatprep.subr.bf16.mxu0 0
    %488 = vmatpush1.bf16.xpose.msra.mxu0 0
    %489 = vmatprep.mubr.bf16.mxu0 0
    %490 = vmatmul.mubr.bf16.gmra.mrb[0].mxu0 %v402
    %v491 = vpop.f32.mrb[0].mxu0
    %v492 = vadd.f32 0.0, %v491
    %v493 = vpop.f32.mrb[0].mxu0
    %v494 = vpop.f32.mrb[0].mxu0
    %v495 = vpop.f32.mrb[0].mxu0
    %496 = vdwg.mxu0
    %v497 = vmul.f32 %v452, 0.17677669
    %v498 = vmul.f32 %v492, 0.17677669
    %v501 = vlaneseq
    %v502 = vshrl.u32 %v501, 7
    %v503 = vsub.s32 0, %v502
    %v504 = vrot.slane %v121, %v503
    %v505 = vlaneseq
    %v506 = vshrl.u32 %v505, 7
    %v507 = vsub.s32 0, %v506
    %v508 = vrot.slane %v122, %v507
    %v511 = vadd.f32 %v497, %v504
    %v512 = vadd.f32 %v498, %v508
    %vm513 = vcmask 64512
    %v514 = vsel %vm513, %v511, -inf
    %515 = vmax.xlane.f32.xlu0 %v514
    %v516 = vpop.xlane.xlu0 %515
    %v517 = vsel %vm513, %v512, -inf
    %518 = vmax.xlane.f32.xlu0 %v517
    %v519 = vpop.xlane.xlu0 %518
    %v520 = vsub.f32 %v511, %v516
    %v521 = vsub.f32 %v512, %v519
    %v522 = vmul.f32 %v520, 1.442695
    %v523 = vpow.pop %v522
    %v524 = vmul.f32 %v521, 1.442695
    %v525 = vpow.pop %v524
    %v526 = vsel %vm513, %v523, 0.0
    %527 = vadd.xlane.f32.xlu0 %v526
    %v528 = vpop.xlane.xlu0 %527
    %v529 = vsel %vm513, %v525, 0.0
    %530 = vadd.xlane.f32.xlu0 %v529
    %v531 = vpop.xlane.xlu0 %530
    %v532 = vrcp.pop %v528
    %v533 = vrcp.pop %v531
    %v534 = vmul.f32 %v523, %v532
    %v535 = vmul.f32 %v525, %v533
    %v536 = vpack.c.bf16 %v534, %v534
    %v537 = vpack.c.bf16 %v535, %v535
    %v539 = vsel %vm513, %v536, 0
    %vm541 = vcmask 1043456
    %v543 = vsel %vm541, %v415, 0
    %545 = vmatprep.subr.bf16.mxu0 0
    %546 = vmatpush1.bf16.msra.mxu0 %v543
    %547 = vmatprep.subr.bf16.mxu0 0
    %548 = vmatpush1.bf16.msra.mxu0 0
    %549 = vmatprep.subr.bf16.mxu0 0
    %550 = vmatpush1.bf16.msra.mxu0 0
    %551 = vmatprep.subr.bf16.mxu0 0
    %552 = vmatpush1.bf16.msra.mxu0 0
    %553 = vmatprep.subr.bf16.mxu0 0
    %554 = vmatpush1.bf16.msra.mxu0 0
    %555 = vmatprep.subr.bf16.mxu0 0
    %556 = vmatpush1.bf16.msra.mxu0 0
    %557 = vmatprep.subr.bf16.mxu0 0
    %558 = vmatpush1.bf16.msra.mxu0 0
    %559 = vmatprep.subr.bf16.mxu0 0
    %560 = vmatpush1.bf16.msra.mxu0 0
    %561 = vmatprep.subr.bf16.mxu0 0
    %562 = vmatpush1.bf16.msra.mxu0 0
    %563 = vmatprep.subr.bf16.mxu0 0
    %564 = vmatpush1.bf16.msra.mxu0 0
    %565 = vmatprep.subr.bf16.mxu0 0
    %566 = vmatpush1.bf16.msra.mxu0 0
    %567 = vmatprep.subr.bf16.mxu0 0
    %568 = vmatpush1.bf16.msra.mxu0 0
    %569 = vmatprep.subr.bf16.mxu0 0
    %570 = vmatpush1.bf16.msra.mxu0 0
    %571 = vmatprep.subr.bf16.mxu0 0
    %572 = vmatpush1.bf16.msra.mxu0 0
    %573 = vmatprep.subr.bf16.mxu0 0
    %574 = vmatpush1.bf16.msra.mxu0 0
    %575 = vmatprep.subr.bf16.mxu0 0
    %576 = vmatpush1.bf16.msra.mxu0 0
    %577 = vmatprep.mubr.bf16.mxu0 0
    %578 = vmatmul.mubr.bf16.gmra.mrb[0].mxu0 %v539
    %v579 = vpop.f32.mrb[0].mxu0
    %v580 = vadd.f32 0.0, %v579
    %v581 = vpop.f32.mrb[0].mxu0
    %v582 = vpop.f32.mrb[0].mxu0
    %v583 = vpop.f32.mrb[0].mxu0
    %584 = vdwg.mxu0
    %v586 = vsel %vm513, %v537, 0
    %v589 = vsel %vm541, %v416, 0
    %591 = vmatprep.subr.bf16.mxu0 0
    %592 = vmatpush1.bf16.msra.mxu0 %v589
    %593 = vmatprep.subr.bf16.mxu0 0
    %594 = vmatpush1.bf16.msra.mxu0 0
    %595 = vmatprep.subr.bf16.mxu0 0
    %596 = vmatpush1.bf16.msra.mxu0 0
    %597 = vmatprep.subr.bf16.mxu0 0
    %598 = vmatpush1.bf16.msra.mxu0 0
    %599 = vmatprep.subr.bf16.mxu0 0
    %600 = vmatpush1.bf16.msra.mxu0 0
    %601 = vmatprep.subr.bf16.mxu0 0
    %602 = vmatpush1.bf16.msra.mxu0 0
    %603 = vmatprep.subr.bf16.mxu0 0
    %604 = vmatpush1.bf16.msra.mxu0 0
    %605 = vmatprep.subr.bf16.mxu0 0
    %606 = vmatpush1.bf16.msra.mxu0 0
    %607 = vmatprep.subr.bf16.mxu0 0
    %608 = vmatpush1.bf16.msra.mxu0 0
    %609 = vmatprep.subr.bf16.mxu0 0
    %610 = vmatpush1.bf16.msra.mxu0 0
    %611 = vmatprep.subr.bf16.mxu0 0
    %612 = vmatpush1.bf16.msra.mxu0 0
    %613 = vmatprep.subr.bf16.mxu0 0
    %614 = vmatpush1.bf16.msra.mxu0 0
    %615 = vmatprep.subr.bf16.mxu0 0
    %616 = vmatpush1.bf16.msra.mxu0 0
    %617 = vmatprep.subr.bf16.mxu0 0
    %618 = vmatpush1.bf16.msra.mxu0 0
    %619 = vmatprep.subr.bf16.mxu0 0
    %620 = vmatpush1.bf16.msra.mxu0 0
    %621 = vmatprep.subr.bf16.mxu0 0
    %622 = vmatpush1.bf16.msra.mxu0 0
    %623 = vmatprep.mubr.bf16.mxu0 0
    %624 = vmatmul.mubr.bf16.gmra.mrb[0].mxu0 %v586
    %v625 = vpop.f32.mrb[0].mxu0
    %v626 = vadd.f32 0.0, %v625
    %v627 = vpop.f32.mrb[0].mxu0
    %v628 = vpop.f32.mrb[0].mxu0
    %v629 = vpop.f32.mrb[0].mxu0
    %630 = vdwg.mxu0
    %v631 = vpack.c.bf16 %v626, %v580
    %v632 = vld [vmem:[#allocation7] sm:$0xf]
    %v633 = vld [vmem:[#allocation7 + $0x4] sm:$0xf]
    %v634 = vld [vmem:[#allocation7 + $0x8] sm:$0xf]
    %v635 = vld [vmem:[#allocation7 + $0xc] sm:$0xf]
    %v636 = vld [vmem:[#allocation7 + $0x10] sm:$0xf]
    %v637 = vld [vmem:[#allocation7 + $0x14] sm:$0xf]
    %v638 = vld [vmem:[#allocation7 + $0x18] sm:$0xf]
    %v639 = vld [vmem:[#allocation7 + $0x1c] sm:$0xf]
    %v640 = vld [vmem:[#allocation7 + $0x20] sm:$0xf]
    %v641 = vld [vmem:[#allocation7 + $0x24] sm:$0xf]
    %v642 = vld [vmem:[#allocation7 + $0x28] sm:$0xf]
    %v643 = vld [vmem:[#allocation7 + $0x2c] sm:$0xf]
    %v644 = vld [vmem:[#allocation7 + $0x30] sm:$0xf]
    %v645 = vld [vmem:[#allocation7 + $0x34] sm:$0xf]
    %v646 = vld [vmem:[#allocation7 + $0x38] sm:$0xf]
    %v647 = vld [vmem:[#allocation7 + $0x3c] sm:$0xf]
    %v648 = vld [vmem:[%s5] sm:$0x1]
    %v650 = vlaneseq
    %v651 = vshrl.u32 %v650, 7
    %v652 = vsub.s32 0, %v651
    %v653 = vrot.slane %v648, %v652
    %v671 = vunpack.c.l.b16 %v632
    %v672 = vunpack.c.l.b16 %v633
    %v673 = vunpack.c.l.b16 %v634
    %v674 = vunpack.c.l.b16 %v635
    %v675 = vunpack.c.l.b16 %v636
    %v676 = vunpack.c.l.b16 %v637
    %v677 = vunpack.c.l.b16 %v638
    %v678 = vunpack.c.l.b16 %v639
    %v679 = vunpack.c.l.b16 %v640
    %v680 = vunpack.c.l.b16 %v641
    %v681 = vunpack.c.l.b16 %v642
    %v682 = vunpack.c.l.b16 %v643
    %v683 = vunpack.c.l.b16 %v644
    %v684 = vunpack.c.l.b16 %v645
    %v685 = vunpack.c.l.b16 %v646
    %v686 = vunpack.c.l.b16 %v647
    %v687 = vpack.c.b16 %v672, %v671
    %v688 = vpack.c.b16 %v674, %v673
    %v689 = vpack.c.b16 %v676, %v675
    %v690 = vpack.c.b16 %v678, %v677
    %v691 = vpack.c.b16 %v680, %v679
    %v692 = vpack.c.b16 %v682, %v681
    %v693 = vpack.c.b16 %v684, %v683
    %v694 = vpack.c.b16 %v686, %v685
    %703 = vmatprep.subr.bf16.mxu0 0
    %704 = vmatpush1.bf16.msra.mxu0 %v687
    %705 = vmatprep.subr.bf16.mxu0 0
    %706 = vmatpush1.bf16.msra.mxu0 %v688
    %707 = vmatprep.subr.bf16.mxu0 0
    %708 = vmatpush1.bf16.msra.mxu0 %v689
    %709 = vmatprep.subr.bf16.mxu0 0
    %710 = vmatpush1.bf16.msra.mxu0 %v690
    %711 = vmatprep.subr.bf16.mxu0 0
    %712 = vmatpush1.bf16.msra.mxu0 %v691
    %713 = vmatprep.subr.bf16.mxu0 0
    %714 = vmatpush1.bf16.msra.mxu0 %v692
    %715 = vmatprep.subr.bf16.mxu0 0
    %716 = vmatpush1.bf16.msra.mxu0 %v693
    %717 = vmatprep.subr.bf16.mxu0 0
    %718 = vmatpush1.bf16.msra.mxu0 %v694
    %719 = vmatprep.subr.bf16.mxu0 0
    %720 = vmatpush1.bf16.msra.mxu0 0
    %721 = vmatprep.subr.bf16.mxu0 0
    %722 = vmatpush1.bf16.msra.mxu0 0
    %723 = vmatprep.subr.bf16.mxu0 0
    %724 = vmatpush1.bf16.msra.mxu0 0
    %725 = vmatprep.subr.bf16.mxu0 0
    %726 = vmatpush1.bf16.msra.mxu0 0
    %727 = vmatprep.subr.bf16.mxu0 0
    %728 = vmatpush1.bf16.msra.mxu0 0
    %729 = vmatprep.subr.bf16.mxu0 0
    %730 = vmatpush1.bf16.msra.mxu0 0
    %731 = vmatprep.subr.bf16.mxu0 0
    %732 = vmatpush1.bf16.msra.mxu0 0
    %733 = vmatprep.subr.bf16.mxu0 0
    %734 = vmatpush1.bf16.msra.mxu0 0
    %735 = vmatprep.mubr.bf16.mxu0 0
    %736 = vmatmul.mubr.bf16.gmra.mrb[0].mxu0 %v631
    %v737 = vpop.f32.mrb[0].mxu0
    %v738 = vadd.f32 %v653, %v737
    %v739 = vpop.f32.mrb[0].mxu0
    %v740 = vpop.f32.mrb[0].mxu0
    %v741 = vadd.f32 %v653, %v740
    %v742 = vpop.f32.mrb[0].mxu0
    %743 = vdwg.mxu0
    %v744 = vadd.f32 %v119, %v738
    %v745 = vadd.f32 %v120, %v741
    %v746 = vmul.f32 %v744, %v127
    %v747 = vmul.f32 %v745, %v127
    %748 = vadd.xlane.f32.xlu0 %v746
    %v749 = vpop.xlane.xlu0 %748
    %750 = vadd.xlane.f32.xlu0 %v747
    %v751 = vpop.xlane.xlu0 %750
    %v752 = vmul.f32 %v749, 0.03125
    %v753 = vmul.f32 %v751, 0.03125
    %v754 = vsub.f32 %v744, %v752
    %v755 = vsub.f32 %v745, %v753
    %v756 = vmul.f32 %v754, %v127
    %v757 = vmul.f32 %v755, %v127
    %v758 = vmul.f32 %v756, %v756
    %v759 = vmul.f32 %v757, %v757
    %760 = vadd.xlane.f32.xlu0 %v758
    %v761 = vpop.xlane.xlu0 %760
    %762 = vadd.xlane.f32.xlu0 %v759
    %v763 = vpop.xlane.xlu0 %762
    %v764 = vmul.f32 %v761, 0.03125
    %v765 = vmul.f32 %v763, 0.03125
    %v766 = vadd.f32 %v764, 1e-12
    %v767 = vadd.f32 %v765, 1e-12
    %v768 = vrsqrt.pop %v766
    %v769 = vrsqrt.pop %v767
    %v770 = vmul.f32 %v756, %v768
    %v771 = vmul.f32 %v757, %v769
    %v772 = vld [vmem:[%s6] sm:$0x1]
    %v774 = vlaneseq
    %v775 = vshrl.u32 %v774, 7
    %v776 = vsub.s32 0, %v775
    %v777 = vrot.slane %v772, %v776
    %v779 = vmul.f32 %v770, %v777
    %v780 = vmul.f32 %v771, %v777
    %v781 = vld [vmem:[%s7] sm:$0x1]
    %v783 = vlaneseq
    %v784 = vshrl.u32 %v783, 7
    %v785 = vsub.s32 0, %v784
    %v786 = vrot.slane %v781, %v785
    %v788 = vadd.f32 %v779, %v786
    %v789 = vadd.f32 %v780, %v786
    %v790 = vpack.c.bf16 %v789, %v788
    %v791 = vld [vmem:[#allocation8] sm:$0xf]
    %v792 = vld [vmem:[#allocation8 + $0x4] sm:$0xf]
    %v793 = vld [vmem:[#allocation8 + $0x8] sm:$0xf]
    %v794 = vld [vmem:[#allocation8 + $0xc] sm:$0xf]
    %v795 = vld [vmem:[#allocation8 + $0x10] sm:$0xf]
    %v796 = vld [vmem:[#allocation8 + $0x14] sm:$0xf]
    %v797 = vld [vmem:[#allocation8 + $0x18] sm:$0xf]
    %v798 = vld [vmem:[#allocation8 + $0x1c] sm:$0xf]
    %v799 = vld [vmem:[#allocation8 + $0x20] sm:$0xf]
    %v800 = vld [vmem:[#allocation8 + $0x24] sm:$0xf]
    %v801 = vld [vmem:[#allocation8 + $0x28] sm:$0xf]
    %v802 = vld [vmem:[#allocation8 + $0x2c] sm:$0xf]
    %v803 = vld [vmem:[#allocation8 + $0x30] sm:$0xf]
    %v804 = vld [vmem:[#allocation8 + $0x34] sm:$0xf]
    %v805 = vld [vmem:[#allocation8 + $0x38] sm:$0xf]
    %v806 = vld [vmem:[#allocation8 + $0x3c] sm:$0xf]
    %v807 = vld [vmem:[%s9] sm:$0x1]
    %v809 = vlaneseq
    %v810 = vshrl.u32 %v809, 7
    %v811 = vsub.s32 0, %v810
    %v812 = vrot.slane %v807, %v811
    %v830 = vunpack.c.l.b16 %v791
    %v831 = vunpack.c.l.b16 %v792
    %v832 = vunpack.c.l.b16 %v793
    %v833 = vunpack.c.l.b16 %v794
    %v834 = vunpack.c.l.b16 %v795
    %v835 = vunpack.c.l.b16 %v796
    %v836 = vunpack.c.l.b16 %v797
    %v837 = vunpack.c.l.b16 %v798
    %v838 = vunpack.c.l.b16 %v799
    %v839 = vunpack.c.l.b16 %v800
    %v840 = vunpack.c.l.b16 %v801
    %v841 = vunpack.c.l.b16 %v802
    %v842 = vunpack.c.l.b16 %v803
    %v843 = vunpack.c.l.b16 %v804
    %v844 = vunpack.c.l.b16 %v805
    %v845 = vunpack.c.l.b16 %v806
    %v846 = vpack.c.b16 %v831, %v830
    %v847 = vpack.c.b16 %v833, %v832
    %v848 = vpack.c.b16 %v835, %v834
    %v849 = vpack.c.b16 %v837, %v836
    %v850 = vpack.c.b16 %v839, %v838
    %v851 = vpack.c.b16 %v841, %v840
    %v852 = vpack.c.b16 %v843, %v842
    %v853 = vpack.c.b16 %v845, %v844
    %862 = vmatprep.subr.bf16.mxu0 0
    %863 = vmatpush1.bf16.msra.mxu0 %v846
    %864 = vmatprep.subr.bf16.mxu0 0
    %865 = vmatpush1.bf16.msra.mxu0 %v847
    %866 = vmatprep.subr.bf16.mxu0 0
    %867 = vmatpush1.bf16.msra.mxu0 %v848
    %868 = vmatprep.subr.bf16.mxu0 0
    %869 = vmatpush1.bf16.msra.mxu0 %v849
    %870 = vmatprep.subr.bf16.mxu0 0
    %871 = vmatpush1.bf16.msra.mxu0 %v850
    %872 = vmatprep.subr.bf16.mxu0 0
    %873 = vmatpush1.bf16.msra.mxu0 %v851
    %874 = vmatprep.subr.bf16.mxu0 0
    %875 = vmatpush1.bf16.msra.mxu0 %v852
    %876 = vmatprep.subr.bf16.mxu0 0
    %877 = vmatpush1.bf16.msra.mxu0 %v853
    %878 = vmatprep.subr.bf16.mxu0 0
    %879 = vmatpush1.bf16.msra.mxu0 0
    %880 = vmatprep.subr.bf16.mxu0 0
    %881 = vmatpush1.bf16.msra.mxu0 0
    %882 = vmatprep.subr.bf16.mxu0 0
    %883 = vmatpush1.bf16.msra.mxu0 0
    %884 = vmatprep.subr.bf16.mxu0 0
    %885 = vmatpush1.bf16.msra.mxu0 0
    %886 = vmatprep.subr.bf16.mxu0 0
    %887 = vmatpush1.bf16.msra.mxu0 0
    %888 = vmatprep.subr.bf16.mxu0 0
    %889 = vmatpush1.bf16.msra.mxu0 0
    %890 = vmatprep.subr.bf16.mxu0 0
    %891 = vmatpush1.bf16.msra.mxu0 0
    %892 = vmatprep.subr.bf16.mxu0 0
    %893 = vmatpush1.bf16.msra.mxu0 0
    %894 = vmatprep.mubr.bf16.mxu0 0
    %895 = vmatmul.mubr.bf16.gmra.mrb[0].mxu0 %v790
    %v896 = vpop.f32.mrb[0].mxu0
    %v897 = vadd.f32 %v812, %v896
    %v898 = vpop.f32.mrb[0].mxu0
    %v899 = vpop.f32.mrb[0].mxu0
    %v900 = vadd.f32 %v812, %v899
    %v901 = vpop.f32.mrb[0].mxu0
    %902 = vdwg.mxu0
    %v903 = vmul.f32 %v897, 0.5
    %v904 = vmul.f32 %v900, 0.5
    %v905 = vmul.f32 %v897, %v897
    %v906 = vmul.f32 %v900, %v900
    %v907 = vmul.f32 %v905, 0.035677407
    %v908 = vmul.f32 %v906, 0.035677407
    %v909 = vadd.f32 %v907, 0.7978846
    %v910 = vadd.f32 %v908, 0.7978846
    %v911 = vmul.f32 %v897, %v909
    %v912 = vmul.f32 %v900, %v910
    %v913 = vtanh.pop %v911
    %v914 = vtanh.pop %v912
    %v915 = vadd.f32 %v913, 1.0
    %v916 = vadd.f32 %v914, 1.0
    %v917 = vmul.f32 %v903, %v915
    %v918 = vmul.f32 %v904, %v916
    %v919 = vpack.c.bf16 %v918, %v917
    %v920 = vld [vmem:[#allocation10] sm:$0xf]
    %v921 = vld [vmem:[#allocation10 + $0x4] sm:$0xf]
    %v922 = vld [vmem:[#allocation10 + $0x8] sm:$0xf]
    %v923 = vld [vmem:[#allocation10 + $0xc] sm:$0xf]
    %v924 = vld [vmem:[#allocation10 + $0x10] sm:$0xf]
    %v925 = vld [vmem:[#allocation10 + $0x14] sm:$0xf]
    %v926 = vld [vmem:[#allocation10 + $0x18] sm:$0xf]
    %v927 = vld [vmem:[#allocation10 + $0x1c] sm:$0xf]
    %v928 = vld [vmem:[#allocation10 + $0x20] sm:$0xf]
    %v929 = vld [vmem:[#allocation10 + $0x24] sm:$0xf]
    %v930 = vld [vmem:[#allocation10 + $0x28] sm:$0xf]
    %v931 = vld [vmem:[#allocation10 + $0x2c] sm:$0xf]
    %v932 = vld [vmem:[#allocation10 + $0x30] sm:$0xf]
    %v933 = vld [vmem:[#allocation10 + $0x34] sm:$0xf]
    %v934 = vld [vmem:[#allocation10 + $0x38] sm:$0xf]
    %v935 = vld [vmem:[#allocation10 + $0x3c] sm:$0xf]
    %v936 = vld [vmem:[%s11] sm:$0x1]
    %v938 = vlaneseq
    %v939 = vshrl.u32 %v938, 7
    %v940 = vsub.s32 0, %v939
    %v941 = vrot.slane %v936, %v940
    %v959 = vunpack.c.l.b16 %v920
    %v960 = vunpack.c.l.b16 %v921
    %v961 = vunpack.c.l.b16 %v922
    %v962 = vunpack.c.l.b16 %v923
    %v963 = vunpack.c.l.b16 %v924
    %v964 = vunpack.c.l.b16 %v925
    %v965 = vunpack.c.l.b16 %v926
    %v966 = vunpack.c.l.b16 %v927
    %v967 = vunpack.c.l.b16 %v928
    %v968 = vunpack.c.l.b16 %v929
    %v969 = vunpack.c.l.b16 %v930
    %v970 = vunpack.c.l.b16 %v931
    %v971 = vunpack.c.l.b16 %v932
    %v972 = vunpack.c.l.b16 %v933
    %v973 = vunpack.c.l.b16 %v934
    %v974 = vunpack.c.l.b16 %v935
    %v975 = vpack.c.b16 %v960, %v959
    %v976 = vpack.c.b16 %v962, %v961
    %v977 = vpack.c.b16 %v964, %v963
    %v978 = vpack.c.b16 %v966, %v965
    %v979 = vpack.c.b16 %v968, %v967
    %v980 = vpack.c.b16 %v970, %v969
    %v981 = vpack.c.b16 %v972, %v971
    %v982 = vpack.c.b16 %v974, %v973
    %991 = vmatprep.subr.bf16.mxu0 0
    %992 = vmatpush1.bf16.msra.mxu0 %v975
    %993 = vmatprep.subr.bf16.mxu0 0
    %994 = vmatpush1.bf16.msra.mxu0 %v976
    %995 = vmatprep.subr.bf16.mxu0 0
    %996 = vmatpush1.bf16.msra.mxu0 %v977
    %997 = vmatprep.subr.bf16.mxu0 0
    %998 = vmatpush1.bf16.msra.mxu0 %v978
    %999 = vmatprep.subr.bf16.mxu0 0
    %1000 = vmatpush1.bf16.msra.mxu0 %v979
    %1001 = vmatprep.subr.bf16.mxu0 0
    %1002 = vmatpush1.bf16.msra.mxu0 %v980
    %1003 = vmatprep.subr.bf16.mxu0 0
    %1004 = vmatpush1.bf16.msra.mxu0 %v981
    %1005 = vmatprep.subr.bf16.mxu0 0
    %1006 = vmatpush1.bf16.msra.mxu0 %v982
    %1007 = vmatprep.subr.bf16.mxu0 0
    %1008 = vmatpush1.bf16.msra.mxu0 0
    %1009 = vmatprep.subr.bf16.mxu0 0
    %1010 = vmatpush1.bf16.msra.mxu0 0
    %1011 = vmatprep.subr.bf16.mxu0 0
    %1012 = vmatpush1.bf16.msra.mxu0 0
    %1013 = vmatprep.subr.bf16.mxu0 0
    %1014 = vmatpush1.bf16.msra.mxu0 0
    %1015 = vmatprep.subr.bf16.mxu0 0
    %1016 = vmatpush1.bf16.msra.mxu0 0
    %1017 = vmatprep.subr.bf16.mxu0 0
    %1018 = vmatpush1.bf16.msra.mxu0 0
    %1019 = vmatprep.subr.bf16.mxu0 0
    %1020 = vmatpush1.bf16.msra.mxu0 0
    %1021 = vmatprep.subr.bf16.mxu0 0
    %1022 = vmatpush1.bf16.msra.mxu0 0
    %1023 = vmatprep.mubr.bf16.mxu0 0
    %1024 = vmatmul.mubr.bf16.gmra.mrb[0].mxu0 %v919
    %v1025 = vpop.f32.mrb[0].mxu0
    %v1026 = vadd.f32 %v941, %v1025
    %v1027 = vpop.f32.mrb[0].mxu0
    %v1028 = vpop.f32.mrb[0].mxu0
    %v1029 = vadd.f32 %v941, %v1028
    %v1030 = vpop.f32.mrb[0].mxu0
    %1031 = vdwg.mxu0
    %v1032 = vadd.f32 %v788, %v1026
    %v1033 = vadd.f32 %v789, %v1029
    %v1034 = vmul.f32 %v1032, %v127
    %v1035 = vmul.f32 %v1033, %v127
    %1036 = vadd.xlane.f32.xlu0 %v1034
    %v1037 = vpop.xlane.xlu0 %1036
    %1038 = vadd.xlane.f32.xlu0 %v1035
    %v1039 = vpop.xlane.xlu0 %1038
    %v1040 = vmul.f32 %v1037, 0.03125
    %v1041 = vmul.f32 %v1039, 0.03125
    %v1042 = vsub.f32 %v1032, %v1040
    %v1043 = vsub.f32 %v1033, %v1041
    %v1044 = vmul.f32 %v1042, %v127
    %v1045 = vmul.f32 %v1043, %v127
    %v1046 = vmul.f32 %v1044, %v1044
    %v1047 = vmul.f32 %v1045, %v1045
    %1048 = vadd.xlane.f32.xlu0 %v1046
    %v1049 = vpop.xlane.xlu0 %1048
    %1050 = vadd.xlane.f32.xlu0 %v1047
    %v1051 = vpop.xlane.xlu0 %1050
    %v1052 = vmul.f32 %v1049, 0.03125
    %v1053 = vmul.f32 %v1051, 0.03125
    %v1054 = vadd.f32 %v1052, 1e-12
    %v1055 = vadd.f32 %v1053, 1e-12
    %v1056 = vrsqrt.pop %v1054
    %v1057 = vrsqrt.pop %v1055
    %v1058 = vmul.f32 %v1044, %v1056
    %v1059 = vmul.f32 %v1045, %v1057
    %v1060 = vld [vmem:[%s12] sm:$0x1]
    %v1062 = vlaneseq
    %v1063 = vshrl.u32 %v1062, 7
    %v1064 = vsub.s32 0, %v1063
    %v1065 = vrot.slane %v1060, %v1064
    %v1067 = vmul.f32 %v1058, %v1065
    %v1068 = vmul.f32 %v1059, %v1065
    %v1069 = vld [vmem:[%s13] sm:$0x1]
    %v1071 = vlaneseq
    %v1072 = vshrl.u32 %v1071, 7
    %v1073 = vsub.s32 0, %v1072
    %v1074 = vrot.slane %v1069, %v1073
    %v1076 = vadd.f32 %v1067, %v1074
    %v1077 = vadd.f32 %v1068, %v1074
    %v1078 = vpack.c.bf16 %v1076, %v1076
    %v1079 = vpack.c.bf16 %v1077, %v1077
    %1080 = vst [vmem:[#allocation11] sm:$0xf] %v1078
    %1081 = vst [vmem:[#allocation11 + $0x4] sm:$0xf] %v1079
    // Predicated region
    $region78: #{tpu_custom_call.1} parent=1 // pred_check
      _
    $region79: #{tpu_custom_call.1} parent=1 // pred_check_branch
      %1083 = sbr.rel (0) target = $region81
    $region80: #{tpu_custom_call.1} parent=1 // pred_region
      %s1085 = ssub.s32 128, 128
      %1086 = vsyncadd [#allocation4], %s1085
      %s1087 = sshll.u32 [#allocation11], 4
      %s1088 = int_to_ptr.vmem [resolvable:$true] %s1087
      %1093 = dma.vmem_to_hbm [thread:$0]  %s1088, 128, %s14, [#allocation4], 64, 64, 4
    $region81: #{tpu_custom_call.1} parent=1 // pred_fallthru
      _
    // Predicated region
    $region82: #{tpu_custom_call.1} parent=1 // pred_check
      _
    $region83: #{tpu_custom_call.1} parent=1 // pred_check_branch
      %1095 = sbr.rel (0) target = $region85
    $region84: #{tpu_custom_call.1} parent=1 // pred_region
      %1096 = dma.done [#allocation4], 128
    $region85: #{tpu_custom_call.1} parent=1 // pred_fallthru
      _
    %1097 = vsyncpa [#allocation3], 1
    %1098 = vsyncpa [#allocation6], 1
    %1099 = vsyncpa [#allocation9], 1
    %1100 = vsyncpa [#allocation4], 1

</llo_original>
